<compile_context>
chip_gen: v6e
topology: v6e:2x2x1
jax: 0.10.0
libtpu: 0.0.40
codegen_flags: <defaults>
</compile_context>

<pallas_src>
import functools

import jax
import jax.numpy as jnp
from jax.experimental import pallas as pl
from jax.experimental.pallas import tpu as pltpu


def _sublane_multiple(dtype) -> int:
    """Minimum second-to-last block dim for the packed dtype layout."""
    itemsize = jnp.dtype(dtype).itemsize
    return {4: 8, 2: 16, 1: 32}.get(itemsize, 8)


def _round_up(x: int, m: int) -> int:
    return ((x + m - 1) // m) * m


def _gen_params() -> tuple[int, int]:
    """(target bytes per input block, vmem_limit_bytes), per TPU generation."""
    kind = ""
    try:
        kind = jax.devices()[0].device_kind.lower()
    except Exception:  # pragma: no cover - no devices at trace time
        pass
    if "v5" in kind:
        # ~0.82 TB/s: 2 MiB is already ~5 us of DMA; bigger buys nothing.
        return 2 * 1024 * 1024, 32 * 1024 * 1024
    if "v7" in kind or "7x" in kind:
        # 3.2 TB/s + 64 MiB physical VMEM: bigger blocks amortize the ~0.35 us
        # per-step overhead; 2 inputs x 2 buffers x 6 MiB = 24 MiB of pipeline
        # buffers + f32 temporaries still fits with headroom.
        return 6 * 1024 * 1024, 48 * 1024 * 1024
    # v6e (and default).
    return 4 * 1024 * 1024, 48 * 1024 * 1024


def _choose_block_rows(n: int, c: int, dtype, target_bytes: int) -> int:
    sub = _sublane_multiple(dtype)
    itemsize = jnp.dtype(dtype).itemsize
    # Size against the f32 in-kernel footprint (inputs are upcast to f32), not
    # the possibly-narrower input itemsize, so bf16 inputs don't double the
    # tile and blow the scoped VMEM limit with f32 temporaries.
    bytes_per_row = c * max(itemsize, 4)
    tm = max(sub, (target_bytes // max(1, bytes_per_row)) // sub * sub)
    # Keep the grid at >=4 (or >=2) steps so the pipeline overlaps DMA with
    # compute and the "parallel" axis can shard across two v7x TensorCores.
    if n >= 4 * sub:
        tm = min(tm, _round_up(-(-n // 4), sub))
    elif n >= 2 * sub:
        tm = min(tm, _round_up(-(-n // 2), sub))
    # Never larger than the (sublane-rounded) batch itself.
    tm = min(tm, _round_up(n, sub))
    return max(sub, tm)


def _distill_kl_kernel(ys_ref, yt_ref, out_ref, *, inv_T: float, n_rows: int,
                       tm: int, mask_tail: bool):
    """Partial KL(p_t || p_s) sum for one (TM, C) tile -> scalar SMEM output.

    Fused per-row form:
        kl = (1/z_t) * sum_j e_t * (yt_shift - ys_shift) + (log z_s - log z_t)
    avoiding materialization of p_t / log_p_t / log_p_s tiles.
    """
    ys = ys_ref[...].astype(jnp.float32) * inv_T
    yt = yt_ref[...].astype(jnp.float32) * inv_T

    ys_shift = ys - jnp.max(ys, axis=1, keepdims=True)
    yt_shift = yt - jnp.max(yt, axis=1, keepdims=True)

    e_t = jnp.exp(yt_shift)                                    # EUP
    z_t = jnp.sum(e_t, axis=1, keepdims=True)                  # XLU row-reduce
    z_s = jnp.sum(jnp.exp(ys_shift), axis=1, keepdims=True)

    inner = jnp.sum(e_t * (yt_shift - ys_shift), axis=1, keepdims=True)
    # Per-row reciprocal on a (TM, 1) column; approx=True uses the otherwise
    # idle EUP vrcp slot.  Accuracy impact is far below KD-loss needs.
    kl_rows = inner * pl.reciprocal(z_t, approx=True) + (jnp.log(z_s) - jnp.log(z_t))

    if mask_tail:
        # Tail tile: zero out rows past the true batch before the tile reduce.
        # All math above is strictly per-row, so garbage rows cannot
        # contaminate valid ones, and jnp.where drops any NaN they produced.
        row0 = pl.program_id(0) * tm
        row_ids = row0 + jax.lax.broadcasted_iota(jnp.int32, (tm, 1), 0)
        kl_rows = jnp.where(row_ids < n_rows, kl_rows, 0.0)

    out_ref[0, 0] = jnp.sum(kl_rows)


def distill_kl(y_s: jax.Array, y_t: jax.Array, T: float, *, block_rows=None) -> jax.Array:
    """Scalar f32 loss matching DistillKL(T)(y_s, y_t).

    Pass bf16 logits when the producing layer already has them: the kernel is
    HBM-bandwidth-bound and upcasts in-register, so bf16 inputs roughly halve
    the end-to-end time with all math still in f32.
    """
    assert y_s.shape == y_t.shape and y_s.ndim == 2
    N, C = y_s.shape
    target_bytes, vmem_limit = _gen_params()
    sub = _sublane_multiple(y_s.dtype)
    if block_rows is None:
        tm = _choose_block_rows(N, C, y_s.dtype, target_bytes)
    else:
        tm = max(sub, _round_up(int(block_rows), sub))

    num_tiles = -(-N // tm)          # cdiv; no padded copy of the logits.
    mask_tail = (N % tm) != 0

    kernel = functools.partial(
        _distill_kl_kernel,
        inv_T=1.0 / float(T), n_rows=N, tm=tm, mask_tail=mask_tail)

    per_tile = pl.pallas_call(
        kernel,
        out_shape=jax.ShapeDtypeStruct((num_tiles, 1), jnp.float32),
        grid=(num_tiles,),
        in_specs=[
            pl.BlockSpec((tm, C), lambda i: (i, 0)),
            pl.BlockSpec((tm, C), lambda i: (i, 0)),
        ],
        # Per-tile scalar partial sum in SMEM: no 1-lane masked vector stores,
        # output HBM traffic is num_tiles * 4 B.
        out_specs=pl.BlockSpec((1, 1), lambda i: (i, 0),
                               memory_space=pltpu.MemorySpace.SMEM),
        compiler_params=pltpu.CompilerParams(
            dimension_semantics=("parallel",),   # independent tiles: 2-TC friendly
            vmem_limit_bytes=vmem_limit,
        ),
    )(y_s, y_t)

    # Tiny num_tiles-length reduction + T^2 / N scaling in XLA (free).
    return jnp.sum(per_tile) * (float(T) * float(T) / N)


def _reference_distill_kl(y_s, y_t, T):
    y_s = y_s.astype(jnp.float32)
    y_t = y_t.astype(jnp.float32)
    log_p_s = jax.nn.log_softmax(y_s / T, axis=1)
    p_t = jax.nn.softmax(y_t / T, axis=1)
    log_p_t = jax.nn.log_softmax(y_t / T, axis=1)
    return jnp.sum(p_t * (log_p_t - log_p_s)) * (T ** 2) / y_s.shape[0]


if __name__ == "__main__":
    key = jax.random.PRNGKey(0)
    k1, k2, k3, k4 = jax.random.split(key, 4)
    T = 4.0
    # Tolerances leave headroom for the EUP approximate reciprocal / bf16 path;
    # formula errors would be orders of magnitude larger.
    RTOL, ATOL = 2e-3, 2e-3

    # Case 1: small single-tile batch (N=8, C=32), f32, divisible -> no mask.
    y_s = jax.random.normal(k1, (8, 32), dtype=jnp.float32)
    y_t = jax.random.normal(k2, (8, 32), dtype=jnp.float32)
    loss = distill_kl(y_s, y_t, T)
    jax.block_until_ready(loss)
    ref = _reference_distill_kl(y_s, y_t, T)
    assert jnp.allclose(loss, ref, rtol=RTOL, atol=ATOL), (loss, ref)

    # Case 2: batch not a multiple of the row tile -> 3-step grid with an
    # in-kernel masked tail tile (N=20, C=128, block_rows=8).  No jnp.pad.
    y_s2 = jax.random.normal(k3, (20, 128), dtype=jnp.float32)
    y_t2 = jax.random.normal(k4, (20, 128), dtype=jnp.float32)
    loss2 = distill_kl(y_s2, y_t2, T, block_rows=8)
    jax.block_until_ready(loss2)
    ref2 = _reference_distill_kl(y_s2, y_t2, T)
    assert jnp.allclose(loss2, ref2, rtol=RTOL, atol=ATOL), (loss2, ref2)

    # Case 3: bf16 logits (halves HBM traffic; in-register math stays f32),
    # masked tail (20 % 16 != 0).
    y_s3 = y_s2.astype(jnp.bfloat16)
    y_t3 = y_t2.astype(jnp.bfloat16)
    loss3 = distill_kl(y_s3, y_t3, T, block_rows=16)
    jax.block_until_ready(loss3)
    ref3 = _reference_distill_kl(y_s3, y_t3, T)
    assert jnp.allclose(loss3, ref3, rtol=RTOL, atol=ATOL), (loss3, ref3)

    # Case 4: auto block sizing on a slightly larger, non-divisible batch.
    y_s4 = jax.random.normal(k1, (100, 64), dtype=jnp.float32)
    y_t4 = jax.random.normal(k2, (100, 64), dtype=jnp.float32)
    loss4 = distill_kl(y_s4, y_t4, T)
    jax.block_until_ready(loss4)
    ref4 = _reference_distill_kl(y_s4, y_t4, T)
    assert jnp.allclose(loss4, ref4, rtol=RTOL, atol=ATOL), (loss4, ref4)

    print("KERNEL_OK")
</pallas_src>

<mosaic_0001>
module attributes {stable_mosaic.version = 11 : i64} {
  func.func @_distill_kl_kernel(%arg0: i32, %arg1: memref<8x32xf32, #tpu.memory_space<vmem>>, %arg2: memref<8x32xf32, #tpu.memory_space<vmem>>, %arg3: memref<1x1xf32, #tpu.memory_space<smem>>) attributes {dimension_semantics = [#tpu.dimension_semantics<parallel>], iteration_bounds = array<i64: 1>, scalar_prefetch = 0 : i64, scratch_operands = 0 : i64, tpu.core_type = #tpu.core_type<tc>, window_params = [{transform_indices = @transform_0, window_bounds = array<i64: 8, 32>}, {transform_indices = @transform_1, window_bounds = array<i64: 8, 32>}, {transform_indices = @transform_2, window_bounds = array<i64: 1, 1>}]} {
    %c0 = arith.constant 0 : index
    %c0_0 = arith.constant 0 : index
    %0 = vector.load %arg1[%c0, %c0_0] : memref<8x32xf32, #tpu.memory_space<vmem>>, vector<8x32xf32>
    %cst = arith.constant 2.500000e-01 : f32
    %1 = vector.broadcast %cst : f32 to vector<8x32xf32>
    %2 = arith.mulf %0, %1 : vector<8x32xf32>
    %c0_1 = arith.constant 0 : index
    %c0_2 = arith.constant 0 : index
    %3 = vector.load %arg2[%c0_1, %c0_2] : memref<8x32xf32, #tpu.memory_space<vmem>>, vector<8x32xf32>
    %cst_3 = arith.constant 2.500000e-01 : f32
    %4 = vector.broadcast %cst_3 : f32 to vector<8x32xf32>
    %5 = arith.mulf %3, %4 : vector<8x32xf32>
    %cst_4 = arith.constant dense<0xFF800000> : vector<8xf32>
    %6 = vector.multi_reduction <maximumf>, %2, %cst_4 [1] : vector<8x32xf32> to vector<8xf32>
    %7 = vector.shape_cast %6 : vector<8xf32> to vector<8x1xf32>
    %8 = vector.broadcast %7 : vector<8x1xf32> to vector<8x32xf32>
    %9 = arith.subf %2, %8 : vector<8x32xf32>
    %cst_5 = arith.constant dense<0xFF800000> : vector<8xf32>
    %10 = vector.multi_reduction <maximumf>, %5, %cst_5 [1] : vector<8x32xf32> to vector<8xf32>
    %11 = vector.shape_cast %10 : vector<8xf32> to vector<8x1xf32>
    %12 = vector.broadcast %11 : vector<8x1xf32> to vector<8x32xf32>
    %13 = arith.subf %5, %12 : vector<8x32xf32>
    %14 = math.exp %13 : vector<8x32xf32>
    %cst_6 = arith.constant dense<0.000000e+00> : vector<8xf32>
    %15 = vector.multi_reduction <add>, %14, %cst_6 [1] : vector<8x32xf32> to vector<8xf32>
    %16 = vector.shape_cast %15 : vector<8xf32> to vector<8x1xf32>
    %17 = math.exp %9 : vector<8x32xf32>
    %cst_7 = arith.constant dense<0.000000e+00> : vector<8xf32>
    %18 = vector.multi_reduction <add>, %17, %cst_7 [1] : vector<8x32xf32> to vector<8xf32>
    %19 = vector.shape_cast %18 : vector<8xf32> to vector<8x1xf32>
    %20 = arith.subf %13, %9 : vector<8x32xf32>
    %21 = arith.mulf %14, %20 : vector<8x32xf32>
    %cst_8 = arith.constant dense<0.000000e+00> : vector<8xf32>
    %22 = vector.multi_reduction <add>, %21, %cst_8 [1] : vector<8x32xf32> to vector<8xf32>
    %23 = vector.shape_cast %22 : vector<8xf32> to vector<8x1xf32>
    %24 = tpu.reciprocal %16 {approx = true} : vector<8x1xf32> -> vector<8x1xf32>
    %25 = arith.mulf %23, %24 : vector<8x1xf32>
    %26 = math.log %19 : vector<8x1xf32>
    %27 = math.log %16 : vector<8x1xf32>
    %28 = arith.subf %26, %27 : vector<8x1xf32>
    %29 = arith.addf %25, %28 : vector<8x1xf32>
    %30 = vector.shape_cast %29 : vector<8x1xf32> to vector<1x8x1xf32>
    %cst_9 = arith.constant dense<0.000000e+00> : vector<1xf32>
    %31 = vector.multi_reduction <add>, %30, %cst_9 [1, 2] : vector<1x8x1xf32> to vector<1xf32>
    %32 = vector.shape_cast %31 : vector<1xf32> to vector<1x1x1xf32>
    %33 = vector.extract %32[0, 0, 0] : f32 from vector<1x1x1xf32>
    %c0_10 = arith.constant 0 : index
    %c0_11 = arith.constant 0 : index
    %34 = memref.load %arg3[%c0_10, %c0_11] : memref<1x1xf32, #tpu.memory_space<smem>>
    memref.store %33, %arg3[%c0_10, %c0_11] : memref<1x1xf32, #tpu.memory_space<smem>>
    return
  }
  func.func @transform_0(%arg0: i32) -> (i32, i32) {
    %c0_i32 = arith.constant 0 : i32
    %c0_i32_0 = arith.constant 0 : i32
    return %arg0, %c0_i32 : i32, i32
  }
  func.func @transform_1(%arg0: i32) -> (i32, i32) {
    %c0_i32 = arith.constant 0 : i32
    %c0_i32_0 = arith.constant 0 : i32
    return %arg0, %c0_i32 : i32, i32
  }
  func.func @transform_2(%arg0: i32) -> (i32, i32) {
    %c0_i32 = arith.constant 0 : i32
    %c0_i32_0 = arith.constant 0 : i32
    return %arg0, %c0_i32 : i32, i32
  }
}

</mosaic_0001>

<llo_original>
// kernel: tpu_custom_call.1
$region0: #{tpu_custom_call.1}
  #allocation0 [shape = 'u32[]', space=smem, size = 0x4, offset = 0x4, fixed_abs, tag = 'smem constant byte address 0x4 - core index']
  #allocation1 [shape = 'u32[144,128]{1,0:T(1,128)}', space=vmem, size = 0x12000, scoped, tag = 'internal scratch']
  %s0 = inlined_call_operand.hbm [shape: f32[8,32], index: 0, kind: input, shape index: {}]
  %s1 = inlined_call_operand.hbm [shape: f32[8,32], index: 1, kind: input, shape index: {}]
  %s2 = inlined_call_operand.hbm [shape: f32[1,1], index: 2, kind: output, shape index: {}]
  %s3 = sld [smem:[#allocation0]]
  $region26: #{tpu_custom_call.1} parent=0
    _
  %s5 = ssub.s32 1, %s3
  %s6 = scalar_select 0, %s5, %s3
  $region1: #{tpu_custom_call.1} parent=0
    #allocation2 [shape = 'u8[4096]{0}', space=vmem, size = 0x1000, scoped, tag = 'input window, operand 0, single buffered']
    #allocation3 [shape = 's32[1]{0}', space=sflag, size = 0x4, scoped, tag = 'scoped memory for tpu_custom_call.1']
    #allocation4 [shape = 's32[1]{0}', space=sflag, size = 0x4, scoped, tag = 'scoped memory for tpu_custom_call.1']
    #allocation5 [shape = 'u8[4096]{0}', space=vmem, size = 0x1000, scoped, tag = 'input window, operand 1, single buffered']
    #allocation6 [shape = 's32[1]{0}', space=sflag, size = 0x4, scoped, tag = 'scoped memory for tpu_custom_call.1']
    #allocation7 [shape = 'u8[512]{0}', space=smem, size = 0x200, scoped, tag = 'output window, operand 0, single buffered']
    %7 = vsyncpa [#allocation3], 0
    %8 = vsyncpa [#allocation6], 0
    %9 = vsyncpa [#allocation4], 0
    // Predicated region
    $region2: #{tpu_custom_call.1} parent=1 // pred_check
      _
    $region3: #{tpu_custom_call.1} parent=1 // pred_check_branch
      %11 = sbr.rel (0) target = $region5
    $region4: #{tpu_custom_call.1} parent=1 // pred_region
      %s13 = ssub.s32 128, 128
      %14 = vsyncadd [#allocation3], %s13
      %s16 = sshll.u32 [#allocation2], 4
      %s17 = int_to_ptr.vmem [resolvable:$true] %s16
      %19 = dma.hbm_to_vmem [thread:$0]  %s0, 128, %s17, [#allocation3]
    $region5: #{tpu_custom_call.1} parent=1 // pred_fallthru
      _
    // Predicated region
    $region6: #{tpu_custom_call.1} parent=1 // pred_check
      _
    $region7: #{tpu_custom_call.1} parent=1 // pred_check_branch
      %21 = sbr.rel (0) target = $region9
    $region8: #{tpu_custom_call.1} parent=1 // pred_region
      %s23 = ssub.s32 128, 128
      %24 = vsyncadd [#allocation6], %s23
      %s26 = sshll.u32 [#allocation5], 4
      %s27 = int_to_ptr.vmem [resolvable:$true] %s26
      %29 = dma.hbm_to_vmem [thread:$0]  %s1, 128, %s27, [#allocation6]
    $region9: #{tpu_custom_call.1} parent=1 // pred_fallthru
      _
    // Predicated region
    $region10: #{tpu_custom_call.1} parent=1 // pred_check
      _
    $region11: #{tpu_custom_call.1} parent=1 // pred_check_branch
      %31 = sbr.rel (0) target = $region13
    $region12: #{tpu_custom_call.1} parent=1 // pred_region
      %32 = dma.done [#allocation3], 128
    $region13: #{tpu_custom_call.1} parent=1 // pred_fallthru
      _
    // Predicated region
    $region14: #{tpu_custom_call.1} parent=1 // pred_check
      _
    $region15: #{tpu_custom_call.1} parent=1 // pred_check_branch
      %34 = sbr.rel (0) target = $region17
    $region16: #{tpu_custom_call.1} parent=1 // pred_region
      %35 = dma.done [#allocation6], 128
    $region17: #{tpu_custom_call.1} parent=1 // pred_fallthru
      _
    %v36 = vld [vmem:[#allocation2] sm:$0xff]
    %v37 = vmul.f32 %v36, 0.25
    %v38 = vld [vmem:[#allocation5] sm:$0xff]
    %v39 = vmul.f32 %v38, 0.25
    %vm40 = vcmask 261120
    %v41 = vsel %vm40, %v37, -inf
    %42 = vmax.xlane.f32.xlu0 %v41
    %v43 = vpop.xlane.xlu0 %42
    %v44 = vsub.f32 %v37, %v43
    %v45 = vsel %vm40, %v39, -inf
    %46 = vmax.xlane.f32.xlu0 %v45
    %v47 = vpop.xlane.xlu0 %46
    %v48 = vsub.f32 %v39, %v47
    %v49 = vmul.f32 %v48, 1.442695
    %v50 = vpow.pop %v49
    %v51 = vsel %vm40, %v50, 0.0
    %52 = vadd.xlane.f32.xlu0 %v51
    %v53 = vpop.xlane.xlu0 %52
    %v54 = vmul.f32 %v44, 1.442695
    %v55 = vpow.pop %v54
    %v56 = vsel %vm40, %v55, 0.0
    %57 = vadd.xlane.f32.xlu0 %v56
    %v58 = vpop.xlane.xlu0 %57
    %v59 = vsub.f32 %v48, %v44
    %v60 = vmul.f32 %v50, %v59
    %v61 = vsel %vm40, %v60, 0.0
    %62 = vadd.xlane.f32.xlu0 %v61
    %v63 = vpop.xlane.xlu0 %62
    %v64 = vrcp.pop %v53
    %v65 = vmul.f32 %v63, %v64
    %v66 = vlog2.pop %v58
    %v67 = vmul.f32 %v66, 0.6931472
    %v68 = vlog2.pop %v53
    %v69 = vmul.f32 %v68, 0.6931472
    %v70 = vsub.f32 %v67, %v69
    %v71 = vadd.f32 %v65, %v70
    %vm72 = vcmask 7168
    %v73 = vsel %vm72, %v71, 0.0
    %74 = vadd.xlane.f32.xlu0 %v73
    %v75 = vpop.xlane.xlu0 %74
    %v76 = vrot.slane %v75, 4
    %v77 = vadd.f32 %v75, %v76
    %v78 = vrot.slane %v77, 2
    %v79 = vadd.f32 %v77, %v78
    %v80 = vrot.slane %v79, 1
    %v81 = vadd.f32 %v79, %v80
    %s82 = vtos %v81
    %s83 = scalar_lea.smem [#allocation7], 0
    %84 = sst [smem:[%s83]] %s82
    // Predicated region
    $region18: #{tpu_custom_call.1} parent=1 // pred_check
      _
    $region19: #{tpu_custom_call.1} parent=1 // pred_check_branch
      %86 = sbr.rel (0) target = $region21
    $region20: #{tpu_custom_call.1} parent=1 // pred_region
      %s88 = ssub.s32 16, 16
      %89 = vsyncadd [#allocation4], %s88
      %92 = dma.smem_to_hbm [#allocation7], 16, %s2, [#allocation4]
    $region21: #{tpu_custom_call.1} parent=1 // pred_fallthru
      _
    // Predicated region
    $region22: #{tpu_custom_call.1} parent=1 // pred_check
      _
    $region23: #{tpu_custom_call.1} parent=1 // pred_check_branch
      %94 = sbr.rel (0) target = $region25
    $region24: #{tpu_custom_call.1} parent=1 // pred_region
      %95 = dma.done [#allocation4], 16
    $region25: #{tpu_custom_call.1} parent=1 // pred_fallthru
      _
    %96 = sfence
    %97 = vsyncpa [#allocation3], 1
    %98 = vsyncpa [#allocation6], 1
    %99 = vsyncpa [#allocation4], 1

</llo_original>
